<compile_context>
chip_gen: v7x
topology: tpu7x:2x2x1
jax: 0.10.0
libtpu: 0.0.40
codegen_flags: <defaults>
</compile_context>

<pallas_src>
import functools

import jax
import jax.numpy as jnp
from jax import lax
from jax.experimental import pallas as pl
from jax.experimental.pallas import tpu as pltpu


# ---------------------------------------------------------------------------
# Kernel
# ---------------------------------------------------------------------------
def fcresnet_kernel(x_ref,            # (TB, D)   natural-layout batch tile (bf16/f32)
                    w_in_ref,         # (2H, D)   fused fc1a | fc2a first-layer weights
                    b_in_ref,         # (2H, 1)   fused fc1a | fc2a biases (f32)
                    a_ref,            # (O, 2H)   folded second-layer x output-layer
                    c_ref,            # (O, D)    folded residual x output-layer
                    b_out_ref,        # (O, 1)    folded output bias (f32)
                    out_ref,          # (O, TB)
                    *, use_softplus, clip, min_val, max_val):
    """One batch tile; the batch axis stays on the 128 lanes throughout."""
    x = x_ref[...]                                             # (TB, D)

    # Contract the feature axis of both operands (flash-attention NT pattern):
    # batch lands on MXU-N / VPU lanes with no explicit transpose of x.
    dn = (((1,), (1,)), ((), ()))

    # Fused first layers of both branches: one MXU matmul instead of two.
    h = lax.dot_general(w_in_ref[...], x, dn,
                        preferred_element_type=jnp.float32)    # (2H, TB)
    h = jnp.maximum(h + b_in_ref[...], 0.0)                    # bias + ReLU (f32)

    # Folded second layer + residual + output layer: out = A @ h + C @ x^T + b'
    out = jnp.dot(a_ref[...], h.astype(a_ref.dtype),
                  preferred_element_type=jnp.float32)          # (O, TB)
    out = out + lax.dot_general(c_ref[...], x, dn,
                                preferred_element_type=jnp.float32)
    out = out + b_out_ref[...]

    if use_softplus:
        # Softplus(beta=1) + min_val, numerically stable form (f32 epilogue).
        out = jnp.maximum(out, 0.0) + jnp.log1p(jnp.exp(-jnp.abs(out))) + min_val
    if clip:
        out = jnp.clip(out, min_val, max_val)

    out_ref[...] = out.astype(out_ref.dtype)


# ---------------------------------------------------------------------------
# Tiling / sizing helpers
# ---------------------------------------------------------------------------
def _round_up(n, m):
    return (n + m - 1) // m * m


def _cores_per_chip():
    """TensorCores per chip: 2 on megacore / dual-TC parts (v4, v5p, v7x), else 1."""
    try:
        kind = jax.devices()[0].device_kind.lower()
    except Exception:
        return 1
    return 2 if ("v7" in kind or "v5p" in kind or "v4" in kind) else 1


def _plan_batch(B, cores):
    """Choose (padded_batch, batch_tile, num_tiles).

    Batch rides the 128-lane axis, so tiles are multiples of 128 (bumped to the
    256 MXU N-tile when nearly free).  Per-grid-step overhead (~0.35 us)
    dominates at these feature sizes, so tiles are as large as VMEM comfortably
    allows (<= 8192); on dual-TensorCore chips the grid is kept at an even
    length >= 2 so the "parallel" axis feeds both cores.
    """
    max_tb = 8192
    b128 = _round_up(B, 128)
    n = max(cores, pl.cdiv(b128, max_tb))
    if cores > 1:
        n = _round_up(n, cores)
    tb = _round_up(pl.cdiv(b128, n), 128)
    if tb % 256:
        tb256 = _round_up(tb, 256)
        if n * tb256 - B < n * 128:        # only if it does not add a full extra slab
            tb = tb256
    return n * tb, tb, n


def _vmem_limit_bytes(TB, D, H2, O):
    """Right-size the scoped-VMEM request from the tile footprint (lane-padded,
    conservatively 4 B/elem), with ~2x headroom, instead of a fixed 32 MiB cap."""
    lane = 128
    pad_l = lambda n: _round_up(max(n, 1), lane)   # lane (minor-dim) padding
    pad_s = lambda n: _round_up(max(n, 1), 8)      # sublane padding
    x_bufs = 2 * TB * pad_l(D) * 4                             # double-buffered x tiles
    out_bufs = 2 * pad_s(O) * TB * 4                           # double-buffered out tiles
    weights = 2 * 4 * (pad_s(H2) * pad_l(D) + pad_s(O) * pad_l(H2)
                       + pad_s(O) * pad_l(D) + pad_s(H2) * lane + pad_s(O) * lane)
    interm = TB * (pad_s(H2) * 8 + pad_s(O) * 8)               # h (f32+bf16), out accum
    est = x_bufs + out_bufs + weights + interm
    return int(min(48 << 20, max(16 << 20, 2 * est)))


# ---------------------------------------------------------------------------
# Wrapper
# ---------------------------------------------------------------------------
def fcresnet_forward(x, params, *, use_softplus=True, clip=False,
                     min_val=0.01, max_val=100.0, mxu_dtype=jnp.bfloat16):
    """Forward pass of FCResNet('concat').  x: (B, D) -> (B, O).

    params (PyTorch Linear convention, weights (in, out), biases (1, out)):
      (w1a, b1a, w1b, b1b, w2a, b2a, w2b, b2b, wo, bo)
    """
    (w1a, b1a, w1b, b1b, w2a, b2a, w2b, b2b, wo, bo) = params
    B, D = x.shape
    O = wo.shape[1]
    H = w1a.shape[1]
    f32 = jnp.float32

    # ---- one-time algebraic folding of the whole network into 3 matrices ----
    #   h     = relu(W_in @ x^T + b_in)
    #   out^T = A @ h + C @ x^T + b'
    wo_top, wo_bot = wo[:D, :], wo[D:, :]
    w_in = jnp.concatenate([w1a.T, w2a.T], axis=0).astype(mxu_dtype)        # (2H, D)
    b_in = jnp.concatenate([b1a.T, b2a.T], axis=0).astype(f32)              # (2H, 1)
    a_mat = jnp.concatenate([(w1b @ wo_top).T, (w2b @ wo_bot).T],
                            axis=1).astype(mxu_dtype)                       # (O, 2H)
    c_mat = (wo_top + wo_bot).T.astype(mxu_dtype)                           # (O, D)
    b_out = (b1b @ wo_top + b2b @ wo_bot + bo).T.astype(f32)                # (O, 1)

    # ---- batch padding / tiling plan ----------------------------------------
    cores = _cores_per_chip()
    B_pad, TB, n_tiles = _plan_batch(B, cores)
    xk = x if x.dtype == mxu_dtype else x.astype(mxu_dtype)
    if B_pad != B:
        xk = jnp.pad(xk, ((0, B_pad - B), (0, 0)))   # fuses with the cast above

    kernel = functools.partial(
        fcresnet_kernel, use_softplus=bool(use_softplus), clip=bool(clip),
        min_val=float(min_val), max_val=float(max_val))

    def resident(arr):
        # Whole-array block with a constant index map: stays VMEM-resident.
        return pl.BlockSpec(arr.shape, lambda i: (0, 0))

    out_t = pl.pallas_call(
        kernel,
        out_shape=jax.ShapeDtypeStruct((O, B_pad), f32),
        grid=(n_tiles,),
        in_specs=[
            pl.BlockSpec((TB, D), lambda i: (i, 0)),     # natural-layout batch tile
            resident(w_in), resident(b_in),
            resident(a_mat), resident(c_mat), resident(b_out),
        ],
        out_specs=pl.BlockSpec((O, TB), lambda i: (0, i)),   # lane-dense stores
        compiler_params=pltpu.CompilerParams(
            dimension_semantics=("parallel",),               # batch split across TCs
            vmem_limit_bytes=_vmem_limit_bytes(TB, D, 2 * H, O)),
    )(xk, w_in, b_in, a_mat, c_mat, b_out)

    # (O, B_pad) -> (B, O): touches only O=4 rows per sample and fuses with the
    # un-padding slice; the costly (B, D) transpose of x is gone entirely.
    return out_t[:, :B].T


# ---------------------------------------------------------------------------
# Pure-JAX reference (mirrors the PyTorch module) and demo
# ---------------------------------------------------------------------------
def _reference(x, params, *, use_softplus, clip, min_val, max_val):
    (w1a, b1a, w1b, b1b, w2a, b2a, w2b, b2b, wo, bo) = params
    h1 = jnp.maximum(x @ w1a + b1a, 0.0)
    y1 = h1 @ w1b + b1b + x
    h2 = jnp.maximum(x @ w2a + b2a, 0.0)
    y2 = h2 @ w2b + b2b + x
    y = jnp.concatenate([y1, y2], axis=-1)
    out = y @ wo + bo
    if use_softplus:
        out = jax.nn.softplus(out) + min_val
    if clip:
        out = jnp.clip(out, min_val, max_val)
    return out


if __name__ == "__main__":
    # Shapes consistent with the module: input_dim=16, hidden=32, output_dim=4.
    # B=300 (not a multiple of 128) exercises the batch-padding path.
    B, D, H, O = 300, 16, 32, 4
    use_softplus, clip = True, False
    min_val, max_val = 0.01, 100.0

    key = jax.random.PRNGKey(0)
    ks = jax.random.split(key, 11)

    def init(k, shape, fan_in):
        bound = 1.0 / jnp.sqrt(fan_in)
        return jax.random.uniform(k, shape, jnp.float32, -bound, bound)

    x = jax.random.normal(ks[0], (B, D), jnp.float32)

    # fc1 MLP: Linear(D,H) -> ReLU -> (dropout = id) -> Linear(H,D)
    w1a = init(ks[1], (D, H), D);  b1a = init(ks[2], (1, H), D)
    w1b = init(ks[3], (H, D), H);  b1b = init(ks[4], (1, D), H)
    # fc2 MLP: Linear(D,H) -> ReLU -> (dropout = id) -> Linear(H,D)
    w2a = init(ks[5], (D, H), D);  b2a = init(ks[6], (1, H), D)
    w2b = init(ks[7], (H, D), H);  b2b = init(ks[8], (1, D), H)
    # output layer: Linear(2*D, O)   ('concat' architecture)
    wo = init(ks[9], (2 * D, O), 2 * D)
    bo = init(ks[10], (1, O), 2 * D)

    params = (w1a, b1a, w1b, b1b, w2a, b2a, w2b, b2b, wo, bo)
    kwargs = dict(use_softplus=use_softplus, clip=clip,
                  min_val=min_val, max_val=max_val)

    ref = _reference(x, params, **kwargs)

    # f32 MXU path: tight check that the algebraic folding is correct.
    out_f32 = jax.block_until_ready(
        fcresnet_forward(x, params, mxu_dtype=jnp.float32, **kwargs))
    assert out_f32.shape == (B, O)
    assert jnp.allclose(out_f32, ref, atol=5e-3, rtol=5e-3), "f32 mismatch vs reference"

    # Default bf16 MXU path (f32 accumulation + f32 epilogue): looser tolerance.
    out_bf16 = jax.block_until_ready(fcresnet_forward(x, params, **kwargs))
    assert out_bf16.shape == (B, O)
    assert jnp.allclose(out_bf16, ref, atol=5e-2, rtol=5e-2), "bf16 mismatch vs reference"

    print("KERNEL_OK")
</pallas_src>

<mosaic_0001>
module attributes {stable_mosaic.version = 11 : i64} {
  func.func @fcresnet_kernel(%arg0: i32, %arg1: memref<384x16xf32, #tpu.memory_space<vmem>>, %arg2: memref<64x16xf32, #tpu.memory_space<vmem>>, %arg3: memref<64x1xf32, #tpu.memory_space<vmem>>, %arg4: memref<4x64xf32, #tpu.memory_space<vmem>>, %arg5: memref<4x16xf32, #tpu.memory_space<vmem>>, %arg6: memref<4x1xf32, #tpu.memory_space<vmem>>, %arg7: memref<4x384xf32, #tpu.memory_space<vmem>>) attributes {dimension_semantics = [#tpu.dimension_semantics<parallel>], iteration_bounds = array<i64: 1>, scalar_prefetch = 0 : i64, scratch_operands = 0 : i64, tpu.core_type = #tpu.core_type<tc>, window_params = [{transform_indices = @transform_0, window_bounds = array<i64: 384, 16>}, {pipeline_mode = #tpu.pipeline_mode<synchronous>, transform_indices = @transform_1, window_bounds = array<i64: 64, 16>}, {pipeline_mode = #tpu.pipeline_mode<synchronous>, transform_indices = @transform_2, window_bounds = array<i64: 64, 1>}, {pipeline_mode = #tpu.pipeline_mode<synchronous>, transform_indices = @transform_3, window_bounds = array<i64: 4, 64>}, {pipeline_mode = #tpu.pipeline_mode<synchronous>, transform_indices = @transform_4, window_bounds = array<i64: 4, 16>}, {pipeline_mode = #tpu.pipeline_mode<synchronous>, transform_indices = @transform_5, window_bounds = array<i64: 4, 1>}, {transform_indices = @transform_6, window_bounds = array<i64: 4, 384>}]} {
    %c0 = arith.constant 0 : index
    %c0_0 = arith.constant 0 : index
    %0 = vector.load %arg1[%c0, %c0_0] : memref<384x16xf32, #tpu.memory_space<vmem>>, vector<384x16xf32>
    %c0_1 = arith.constant 0 : index
    %c0_2 = arith.constant 0 : index
    %1 = vector.load %arg2[%c0_1, %c0_2] : memref<64x16xf32, #tpu.memory_space<vmem>>, vector<64x16xf32>
    %cst = arith.constant dense<0.000000e+00> : vector<64x384xf32>
    %2 = tpu.matmul %1, %0, %cst {dimension_numbers = #tpu.dot_dimension_numbers<[1], [1], [0], [0], [0, 0, 1, 0], [], []>} : vector<64x16xf32>, vector<384x16xf32>, vector<64x384xf32> -> vector<64x384xf32>
    %c0_3 = arith.constant 0 : index
    %c0_4 = arith.constant 0 : index
    %3 = vector.load %arg3[%c0_3, %c0_4] : memref<64x1xf32, #tpu.memory_space<vmem>>, vector<64x1xf32>
    %4 = vector.broadcast %3 : vector<64x1xf32> to vector<64x384xf32>
    %5 = arith.addf %2, %4 : vector<64x384xf32>
    %cst_5 = arith.constant 0.000000e+00 : f32
    %6 = vector.broadcast %cst_5 : f32 to vector<64x384xf32>
    %7 = arith.maximumf %5, %6 : vector<64x384xf32>
    %c0_6 = arith.constant 0 : index
    %c0_7 = arith.constant 0 : index
    %8 = vector.load %arg4[%c0_6, %c0_7] : memref<4x64xf32, #tpu.memory_space<vmem>>, vector<4x64xf32>
    %cst_8 = arith.constant dense<0.000000e+00> : vector<4x384xf32>
    %9 = tpu.matmul %8, %7, %cst_8 {dimension_numbers = #tpu.dot_dimension_numbers<[1], [0], [0], [1], [0, 0, 1, 1], [], []>} : vector<4x64xf32>, vector<64x384xf32>, vector<4x384xf32> -> vector<4x384xf32>
    %c0_9 = arith.constant 0 : index
    %c0_10 = arith.constant 0 : index
    %10 = vector.load %arg5[%c0_9, %c0_10] : memref<4x16xf32, #tpu.memory_space<vmem>>, vector<4x16xf32>
    %cst_11 = arith.constant dense<0.000000e+00> : vector<4x384xf32>
    %11 = tpu.matmul %10, %0, %cst_11 {dimension_numbers = #tpu.dot_dimension_numbers<[1], [1], [0], [0], [0, 0, 1, 0], [], []>} : vector<4x16xf32>, vector<384x16xf32>, vector<4x384xf32> -> vector<4x384xf32>
    %12 = arith.addf %9, %11 : vector<4x384xf32>
    %c0_12 = arith.constant 0 : index
    %c0_13 = arith.constant 0 : index
    %13 = vector.load %arg6[%c0_12, %c0_13] : memref<4x1xf32, #tpu.memory_space<vmem>>, vector<4x1xf32>
    %14 = vector.broadcast %13 : vector<4x1xf32> to vector<4x384xf32>
    %15 = arith.addf %12, %14 : vector<4x384xf32>
    %cst_14 = arith.constant 0.000000e+00 : f32
    %16 = vector.broadcast %cst_14 : f32 to vector<4x384xf32>
    %17 = arith.maximumf %15, %16 : vector<4x384xf32>
    %18 = math.absf %15 : vector<4x384xf32>
    %cst_15 = arith.constant 0.000000e+00 : f32
    %19 = vector.broadcast %cst_15 : f32 to vector<4x384xf32>
    %20 = arith.subf %19, %18 : vector<4x384xf32>
    %21 = math.exp %20 : vector<4x384xf32>
    %22 = math.log1p %21 : vector<4x384xf32>
    %23 = arith.addf %17, %22 : vector<4x384xf32>
    %cst_16 = arith.constant 0.00999999977 : f32
    %24 = vector.broadcast %cst_16 : f32 to vector<4x384xf32>
    %25 = arith.addf %23, %24 : vector<4x384xf32>
    %c0_17 = arith.constant 0 : index
    %c0_18 = arith.constant 0 : index
    %26 = vector.load %arg7[%c0_17, %c0_18] : memref<4x384xf32, #tpu.memory_space<vmem>>, vector<4x384xf32>
    tpu.vector_store %arg7[%c0_17, %c0_18], %25 {strides = array<i32>} : memref<4x384xf32, #tpu.memory_space<vmem>>, vector<4x384xf32>,
    return
  }
  func.func @transform_0(%arg0: i32) -> (i32, i32) {
    %c0_i32 = arith.constant 0 : i32
    %c0_i32_0 = arith.constant 0 : i32
    return %arg0, %c0_i32 : i32, i32
  }
  func.func @transform_1(%arg0: i32) -> (i32, i32) {
    %c0_i32 = arith.constant 0 : i32
    %c0_i32_0 = arith.constant 0 : i32
    %c0_i32_1 = arith.constant 0 : i32
    return %c0_i32, %c0_i32_0 : i32, i32
  }
  func.func @transform_2(%arg0: i32) -> (i32, i32) {
    %c0_i32 = arith.constant 0 : i32
    %c0_i32_0 = arith.constant 0 : i32
    %c0_i32_1 = arith.constant 0 : i32
    return %c0_i32, %c0_i32_0 : i32, i32
  }
  func.func @transform_3(%arg0: i32) -> (i32, i32) {
    %c0_i32 = arith.constant 0 : i32
    %c0_i32_0 = arith.constant 0 : i32
    %c0_i32_1 = arith.constant 0 : i32
    return %c0_i32, %c0_i32_0 : i32, i32
  }
  func.func @transform_4(%arg0: i32) -> (i32, i32) {
    %c0_i32 = arith.constant 0 : i32
    %c0_i32_0 = arith.constant 0 : i32
    %c0_i32_1 = arith.constant 0 : i32
    return %c0_i32, %c0_i32_0 : i32, i32
  }
  func.func @transform_5(%arg0: i32) -> (i32, i32) {
    %c0_i32 = arith.constant 0 : i32
    %c0_i32_0 = arith.constant 0 : i32
    %c0_i32_1 = arith.constant 0 : i32
    return %c0_i32, %c0_i32_0 : i32, i32
  }
  func.func @transform_6(%arg0: i32) -> (i32, i32) {
    %c0_i32 = arith.constant 0 : i32
    %c0_i32_0 = arith.constant 0 : i32
    return %c0_i32, %arg0 : i32, i32
  }
}

</mosaic_0001>

<llo_original>
// kernel: tpu_custom_call.1
$region0: #{tpu_custom_call.1}
  #allocation0 [shape = 'u32[]', space=smem, size = 0x4, offset = 0x4, fixed_abs, tag = 'smem constant byte address 0x4 - core index']
  #allocation1 [shape = 'u32[144,128]{1,0:T(1,128)}', space=vmem, size = 0x12000, scoped, tag = 'internal scratch']
  %s0 = inlined_call_operand.vmem [shape: f32[384,16], index: 0, kind: input, shape index: {}]
  %s1 = inlined_call_operand.vmem [shape: f32[64,16], index: 1, kind: input, shape index: {}]
  %s2 = inlined_call_operand.vmem [shape: f32[64,1], index: 2, kind: input, shape index: {}]
  %s3 = inlined_call_operand.vmem [shape: f32[4,64], index: 3, kind: input, shape index: {}]
  %s4 = inlined_call_operand.vmem [shape: f32[4,16], index: 4, kind: input, shape index: {}]
  %s5 = inlined_call_operand.vmem [shape: f32[4,1], index: 5, kind: input, shape index: {}]
  %s6 = inlined_call_operand.hbm [shape: f32[4,384], index: 6, kind: output, shape index: {}]
  %s7 = sld [smem:[#allocation0]]
  $region34: #{tpu_custom_call.1} parent=0
    _
  %s9 = ssub.s32 1, %s7
  %s10 = scalar_select 0, %s9, %s7
  $region1: #{tpu_custom_call.1} parent=0
    #allocation2 [shape = 'u8[6144]{0}', space=vmem, size = 0x1800, scoped, tag = 'output window, operand 0, single buffered']
    #allocation3 [shape = 's32[1]{0}', space=sflag, size = 0x4, scoped, tag = 'scoped memory for tpu_custom_call.1']
    %11 = vsyncpa [#allocation3], 0
    // Predicated region
    $region2: #{tpu_custom_call.1} parent=1 // pred_check
      _
    $region3: #{tpu_custom_call.1} parent=1 // pred_check_branch
      %13 = sbr.rel (0) target = $region5
    $region4: #{tpu_custom_call.1} parent=1 // pred_region
      _
    $region5: #{tpu_custom_call.1} parent=1 // pred_fallthru
      _
    // Predicated region
    $region6: #{tpu_custom_call.1} parent=1 // pred_check
      _
    $region7: #{tpu_custom_call.1} parent=1 // pred_check_branch
      %15 = sbr.rel (0) target = $region9
    $region8: #{tpu_custom_call.1} parent=1 // pred_region
      _
    $region9: #{tpu_custom_call.1} parent=1 // pred_fallthru
      _
    // Predicated region
    $region10: #{tpu_custom_call.1} parent=1 // pred_check
      _
    $region11: #{tpu_custom_call.1} parent=1 // pred_check_branch
      %17 = sbr.rel (0) target = $region13
    $region12: #{tpu_custom_call.1} parent=1 // pred_region
      _
    $region13: #{tpu_custom_call.1} parent=1 // pred_fallthru
      _
    // Predicated region
    $region14: #{tpu_custom_call.1} parent=1 // pred_check
      _
    $region15: #{tpu_custom_call.1} parent=1 // pred_check_branch
      %19 = sbr.rel (0) target = $region17
    $region16: #{tpu_custom_call.1} parent=1 // pred_region
      _
    $region17: #{tpu_custom_call.1} parent=1 // pred_fallthru
      _
    // Predicated region
    $region18: #{tpu_custom_call.1} parent=1 // pred_check
      _
    $region19: #{tpu_custom_call.1} parent=1 // pred_check_branch
      %21 = sbr.rel (0) target = $region21
    $region20: #{tpu_custom_call.1} parent=1 // pred_region
      _
    $region21: #{tpu_custom_call.1} parent=1 // pred_fallthru
      _
    // Predicated region
    $region22: #{tpu_custom_call.1} parent=1 // pred_check
      _
    $region23: #{tpu_custom_call.1} parent=1 // pred_check_branch
      %23 = sbr.rel (0) target = $region25
    $region24: #{tpu_custom_call.1} parent=1 // pred_region
      _
    $region25: #{tpu_custom_call.1} parent=1 // pred_fallthru
      _
    %v24 = vld [vmem:[%s0] sm:$0xff]
    %v25 = vld [vmem:[%s0 + $0x8] sm:$0xff]
    %v26 = vld [vmem:[%s0 + $0x10] sm:$0xff]
    %v27 = vld [vmem:[%s0 + $0x18] sm:$0xff]
    %v28 = vld [vmem:[%s0 + $0x20] sm:$0xff]
    %v29 = vld [vmem:[%s0 + $0x28] sm:$0xff]
    %v30 = vld [vmem:[%s0 + $0x30] sm:$0xff]
    %v31 = vld [vmem:[%s0 + $0x38] sm:$0xff]
    %v32 = vld [vmem:[%s0 + $0x40] sm:$0xff]
    %v33 = vld [vmem:[%s0 + $0x48] sm:$0xff]
    %v34 = vld [vmem:[%s0 + $0x50] sm:$0xff]
    %v35 = vld [vmem:[%s0 + $0x58] sm:$0xff]
    %v36 = vld [vmem:[%s0 + $0x60] sm:$0xff]
    %v37 = vld [vmem:[%s0 + $0x68] sm:$0xff]
    %v38 = vld [vmem:[%s0 + $0x70] sm:$0xff]
    %v39 = vld [vmem:[%s0 + $0x78] sm:$0xff]
    %v40 = vld [vmem:[%s0 + $0x80] sm:$0xff]
    %v41 = vld [vmem:[%s0 + $0x88] sm:$0xff]
    %v42 = vld [vmem:[%s0 + $0x90] sm:$0xff]
    %v43 = vld [vmem:[%s0 + $0x98] sm:$0xff]
    %v44 = vld [vmem:[%s0 + $0xa0] sm:$0xff]
    %v45 = vld [vmem:[%s0 + $0xa8] sm:$0xff]
    %v46 = vld [vmem:[%s0 + $0xb0] sm:$0xff]
    %v47 = vld [vmem:[%s0 + $0xb8] sm:$0xff]
    %v48 = vld [vmem:[%s0 + $0xc0] sm:$0xff]
    %v49 = vld [vmem:[%s0 + $0xc8] sm:$0xff]
    %v50 = vld [vmem:[%s0 + $0xd0] sm:$0xff]
    %v51 = vld [vmem:[%s0 + $0xd8] sm:$0xff]
    %v52 = vld [vmem:[%s0 + $0xe0] sm:$0xff]
    %v53 = vld [vmem:[%s0 + $0xe8] sm:$0xff]
    %v54 = vld [vmem:[%s0 + $0xf0] sm:$0xff]
    %v55 = vld [vmem:[%s0 + $0xf8] sm:$0xff]
    %v56 = vld [vmem:[%s0 + $0x100] sm:$0xff]
    %v57 = vld [vmem:[%s0 + $0x108] sm:$0xff]
    %v58 = vld [vmem:[%s0 + $0x110] sm:$0xff]
    %v59 = vld [vmem:[%s0 + $0x118] sm:$0xff]
    %v60 = vld [vmem:[%s0 + $0x120] sm:$0xff]
    %v61 = vld [vmem:[%s0 + $0x128] sm:$0xff]
    %v62 = vld [vmem:[%s0 + $0x130] sm:$0xff]
    %v63 = vld [vmem:[%s0 + $0x138] sm:$0xff]
    %v64 = vld [vmem:[%s0 + $0x140] sm:$0xff]
    %v65 = vld [vmem:[%s0 + $0x148] sm:$0xff]
    %v66 = vld [vmem:[%s0 + $0x150] sm:$0xff]
    %v67 = vld [vmem:[%s0 + $0x158] sm:$0xff]
    %v68 = vld [vmem:[%s0 + $0x160] sm:$0xff]
    %v69 = vld [vmem:[%s0 + $0x168] sm:$0xff]
    %v70 = vld [vmem:[%s0 + $0x170] sm:$0xff]
    %v71 = vld [vmem:[%s0 + $0x178] sm:$0xff]
    %v72 = vld [vmem:[%s1] sm:$0xff]
    %v73 = vld [vmem:[%s1 + $0x8] sm:$0xff]
    %v74 = vld [vmem:[%s1 + $0x10] sm:$0xff]
    %v75 = vld [vmem:[%s1 + $0x18] sm:$0xff]
    %v76 = vld [vmem:[%s1 + $0x20] sm:$0xff]
    %v77 = vld [vmem:[%s1 + $0x28] sm:$0xff]
    %v78 = vld [vmem:[%s1 + $0x30] sm:$0xff]
    %v79 = vld [vmem:[%s1 + $0x38] sm:$0xff]
    %v80 = vld [vmem:[%s2] sm:$0xff]
    %v81 = vld [vmem:[%s2 + $0x8] sm:$0xff]
    %v82 = vld [vmem:[%s2 + $0x10] sm:$0xff]
    %v83 = vld [vmem:[%s2 + $0x18] sm:$0xff]
    %v84 = vld [vmem:[%s2 + $0x20] sm:$0xff]
    %v85 = vld [vmem:[%s2 + $0x28] sm:$0xff]
    %v86 = vld [vmem:[%s2 + $0x30] sm:$0xff]
    %v87 = vld [vmem:[%s2 + $0x38] sm:$0xff]
    %89 = vset.pattern.permute.xlu0 0
    %90 = vperm.xlu0 %89, %v80
    %v91 = vpop.permute.xlu0 %90
    %94 = vset.pattern.permute.xlu0 0
    %95 = vperm.xlu0 %94, %v81
    %v96 = vpop.permute.xlu0 %95
    %99 = vset.pattern.permute.xlu0 0
    %100 = vperm.xlu0 %99, %v82
    %v101 = vpop.permute.xlu0 %100
    %104 = vset.pattern.permute.xlu0 0
    %105 = vperm.xlu0 %104, %v83
    %v106 = vpop.permute.xlu0 %105
    %109 = vset.pattern.permute.xlu0 0
    %110 = vperm.xlu0 %109, %v84
    %v111 = vpop.permute.xlu0 %110
    %114 = vset.pattern.permute.xlu0 0
    %115 = vperm.xlu0 %114, %v85
    %v116 = vpop.permute.xlu0 %115
    %119 = vset.pattern.permute.xlu0 0
    %120 = vperm.xlu0 %119, %v86
    %v121 = vpop.permute.xlu0 %120
    %124 = vset.pattern.permute.xlu0 0
    %125 = vperm.xlu0 %124, %v87
    %v126 = vpop.permute.xlu0 %125
    %vm128 = vcmask 130048
    %v130 = vsel %vm128, %v72, 0
    %v133 = vsel %vm128, %v73, 0
    %v136 = vsel %vm128, %v74, 0
    %v139 = vsel %vm128, %v75, 0
    %v142 = vsel %vm128, %v76, 0
    %v145 = vsel %vm128, %v77, 0
    %v148 = vsel %vm128, %v78, 0
    %v151 = vsel %vm128, %v79, 0
    %v154 = vsel %vm128, %v24, 0
    %v157 = vsel %vm128, %v25, 0
    %v160 = vsel %vm128, %v26, 0
    %v163 = vsel %vm128, %v27, 0
    %v166 = vsel %vm128, %v28, 0
    %v169 = vsel %vm128, %v29, 0
    %v172 = vsel %vm128, %v30, 0
    %v175 = vsel %vm128, %v31, 0
    %v178 = vsel %vm128, %v32, 0
    %v181 = vsel %vm128, %v33, 0
    %v184 = vsel %vm128, %v34, 0
    %v187 = vsel %vm128, %v35, 0
    %v190 = vsel %vm128, %v36, 0
    %v193 = vsel %vm128, %v37, 0
    %v196 = vsel %vm128, %v38, 0
    %v199 = vsel %vm128, %v39, 0
    %v202 = vsel %vm128, %v40, 0
    %v205 = vsel %vm128, %v41, 0
    %v208 = vsel %vm128, %v42, 0
    %v211 = vsel %vm128, %v43, 0
    %v214 = vsel %vm128, %v44, 0
    %v217 = vsel %vm128, %v45, 0
    %v220 = vsel %vm128, %v46, 0
    %v223 = vsel %vm128, %v47, 0
    %v226 = vsel %vm128, %v48, 0
    %v229 = vsel %vm128, %v49, 0
    %v232 = vsel %vm128, %v50, 0
    %v235 = vsel %vm128, %v51, 0
    %v238 = vsel %vm128, %v52, 0
    %v241 = vsel %vm128, %v53, 0
    %v244 = vsel %vm128, %v54, 0
    %v247 = vsel %vm128, %v55, 0
    %v250 = vsel %vm128, %v56, 0
    %v253 = vsel %vm128, %v57, 0
    %v256 = vsel %vm128, %v58, 0
    %v259 = vsel %vm128, %v59, 0
    %v262 = vsel %vm128, %v60, 0
    %v265 = vsel %vm128, %v61, 0
    %v268 = vsel %vm128, %v62, 0
    %v271 = vsel %vm128, %v63, 0
    %v274 = vsel %vm128, %v64, 0
    %v277 = vsel %vm128, %v65, 0
    %v280 = vsel %vm128, %v66, 0
    %v283 = vsel %vm128, %v67, 0
    %v286 = vsel %vm128, %v68, 0
    %v289 = vsel %vm128, %v69, 0
    %v292 = vsel %vm128, %v70, 0
    %v295 = vsel %vm128, %v71, 0
    %297 = vmatprep.subr.mxu0 0.0
    %298 = vmatpush1.xpose.msra.mxu0 %v154
    %299 = vmatprep.subr.mxu0 0.0
    %300 = vmatpush1.xpose.msra.mxu0 %v157
    %301 = vmatprep.subr.mxu0 0.0
    %302 = vmatpush1.xpose.msra.mxu0 %v160
    %303 = vmatprep.subr.mxu0 0.0
    %304 = vmatpush1.xpose.msra.mxu0 %v163
    %305 = vmatprep.subr.mxu0 0.0
    %306 = vmatpush1.xpose.msra.mxu0 %v166
    %307 = vmatprep.subr.mxu0 0.0
    %308 = vmatpush1.xpose.msra.mxu0 %v169
    %309 = vmatprep.subr.mxu0 0.0
    %310 = vmatpush1.xpose.msra.mxu0 %v172
    %311 = vmatprep.subr.mxu0 0.0
    %312 = vmatpush1.xpose.msra.mxu0 %v175
    %313 = vmatprep.subr.mxu0 0.0
    %314 = vmatpush1.xpose.msra.mxu0 %v178
    %315 = vmatprep.subr.mxu0 0.0
    %316 = vmatpush1.xpose.msra.mxu0 %v181
    %317 = vmatprep.subr.mxu0 0.0
    %318 = vmatpush1.xpose.msra.mxu0 %v184
    %319 = vmatprep.subr.mxu0 0.0
    %320 = vmatpush1.xpose.msra.mxu0 %v187
    %321 = vmatprep.subr.mxu0 0.0
    %322 = vmatpush1.xpose.msra.mxu0 %v190
    %323 = vmatprep.subr.mxu0 0.0
    %324 = vmatpush1.xpose.msra.mxu0 %v193
    %325 = vmatprep.subr.mxu0 0.0
    %326 = vmatpush1.xpose.msra.mxu0 %v196
    %327 = vmatprep.subr.mxu0 0.0
    %328 = vmatpush1.xpose.msra.mxu0 %v199
    %329 = vmatprep.subr.mxu0 0.0
    %330 = vmatpush1.xpose.msra.mxu0 %v202
    %331 = vmatprep.subr.mxu0 0.0
    %332 = vmatpush1.xpose.msra.mxu0 %v205
    %333 = vmatprep.subr.mxu0 0.0
    %334 = vmatpush1.xpose.msra.mxu0 %v208
    %335 = vmatprep.subr.mxu0 0.0
    %336 = vmatpush1.xpose.msra.mxu0 %v211
    %337 = vmatprep.subr.mxu0 0.0
    %338 = vmatpush1.xpose.msra.mxu0 %v214
    %339 = vmatprep.subr.mxu0 0.0
    %340 = vmatpush1.xpose.msra.mxu0 %v217
    %341 = vmatprep.subr.mxu0 0.0
    %342 = vmatpush1.xpose.msra.mxu0 %v220
    %343 = vmatprep.subr.mxu0 0.0
    %344 = vmatpush1.xpose.msra.mxu0 %v223
    %345 = vmatprep.subr.mxu0 0.0
    %346 = vmatpush1.xpose.msra.mxu0 %v226
    %347 = vmatprep.subr.mxu0 0.0
    %348 = vmatpush1.xpose.msra.mxu0 %v229
    %349 = vmatprep.subr.mxu0 0.0
    %350 = vmatpush1.xpose.msra.mxu0 %v232
    %351 = vmatprep.subr.mxu0 0.0
    %352 = vmatpush1.xpose.msra.mxu0 %v235
    %353 = vmatprep.subr.mxu0 0.0
    %354 = vmatpush1.xpose.msra.mxu0 %v238
    %355 = vmatprep.subr.mxu0 0.0
    %356 = vmatpush1.xpose.msra.mxu0 %v241
    %357 = vmatprep.subr.mxu0 0.0
    %358 = vmatpush1.xpose.msra.mxu0 %v244
    %359 = vmatprep.subr.mxu0 0.0
    %360 = vmatpush1.xpose.msra.mxu0 %v247
    %361 = vmatprep.mubr.f32.mxu0 0.0
    %362 = vmatmul.mubr.f32.gmra.mrb[0].mxu0 %v130
    %v363 = vpop.f32.mrb[0].mxu0
    %v364 = vadd.f32 %v91, %v363
    %v365 = vpop.f32.mrb[0].mxu0
    %v366 = vadd.f32 %v91, %v365
    %367 = vmatprep.mubr.f32.mxu0 0.0
    %368 = vmatmul.mubr.f32.gmra.mrb[0].mxu0 %v133
    %v369 = vpop.f32.mrb[0].mxu0
    %v370 = vadd.f32 %v96, %v369
    %v371 = vpop.f32.mrb[0].mxu0
    %v372 = vadd.f32 %v96, %v371
    %373 = vmatprep.mubr.f32.mxu0 0.0
    %374 = vmatmul.mubr.f32.gmra.mrb[0].mxu0 %v136
    %v375 = vpop.f32.mrb[0].mxu0
    %v376 = vadd.f32 %v101, %v375
    %v377 = vpop.f32.mrb[0].mxu0
    %v378 = vadd.f32 %v101, %v377
    %379 = vmatprep.mubr.f32.mxu0 0.0
    %380 = vmatmul.mubr.f32.gmra.mrb[0].mxu0 %v139
    %v381 = vpop.f32.mrb[0].mxu0
    %v382 = vadd.f32 %v106, %v381
    %v383 = vpop.f32.mrb[0].mxu0
    %v384 = vadd.f32 %v106, %v383
    %385 = vmatprep.mubr.f32.mxu0 0.0
    %386 = vmatmul.mubr.f32.gmra.mrb[0].mxu0 %v142
    %v387 = vpop.f32.mrb[0].mxu0
    %v388 = vadd.f32 %v111, %v387
    %v389 = vpop.f32.mrb[0].mxu0
    %v390 = vadd.f32 %v111, %v389
    %391 = vmatprep.mubr.f32.mxu0 0.0
    %392 = vmatmul.mubr.f32.gmra.mrb[0].mxu0 %v145
    %v393 = vpop.f32.mrb[0].mxu0
    %v394 = vadd.f32 %v116, %v393
    %v395 = vpop.f32.mrb[0].mxu0
    %v396 = vadd.f32 %v116, %v395
    %397 = vmatprep.mubr.f32.mxu0 0.0
    %398 = vmatmul.mubr.f32.gmra.mrb[0].mxu0 %v148
    %v399 = vpop.f32.mrb[0].mxu0
    %v400 = vadd.f32 %v121, %v399
    %v401 = vpop.f32.mrb[0].mxu0
    %v402 = vadd.f32 %v121, %v401
    %403 = vmatprep.mubr.f32.mxu0 0.0
    %404 = vmatmul.mubr.f32.gmra.mrb[0].mxu0 %v151
    %v405 = vpop.f32.mrb[0].mxu0
    %v406 = vadd.f32 %v126, %v405
    %v407 = vpop.f32.mrb[0].mxu0
    %v408 = vadd.f32 %v126, %v407
    %409 = vdwg.mxu0
    %410 = vmatprep.subr.mxu0 0.0
    %411 = vmatpush1.xpose.msra.mxu0 %v250
    %412 = vmatprep.subr.mxu0 0.0
    %413 = vmatpush1.xpose.msra.mxu0 %v253
    %414 = vmatprep.subr.mxu0 0.0
    %415 = vmatpush1.xpose.msra.mxu0 %v256
    %416 = vmatprep.subr.mxu0 0.0
    %417 = vmatpush1.xpose.msra.mxu0 %v259
    %418 = vmatprep.subr.mxu0 0.0
    %419 = vmatpush1.xpose.msra.mxu0 %v262
    %420 = vmatprep.subr.mxu0 0.0
    %421 = vmatpush1.xpose.msra.mxu0 %v265
    %422 = vmatprep.subr.mxu0 0.0
    %423 = vmatpush1.xpose.msra.mxu0 %v268
    %424 = vmatprep.subr.mxu0 0.0
    %425 = vmatpush1.xpose.msra.mxu0 %v271
    %426 = vmatprep.subr.mxu0 0.0
    %427 = vmatpush1.xpose.msra.mxu0 %v274
    %428 = vmatprep.subr.mxu0 0.0
    %429 = vmatpush1.xpose.msra.mxu0 %v277
    %430 = vmatprep.subr.mxu0 0.0
    %431 = vmatpush1.xpose.msra.mxu0 %v280
    %432 = vmatprep.subr.mxu0 0.0
    %433 = vmatpush1.xpose.msra.mxu0 %v283
    %434 = vmatprep.subr.mxu0 0.0
    %435 = vmatpush1.xpose.msra.mxu0 %v286
    %436 = vmatprep.subr.mxu0 0.0
    %437 = vmatpush1.xpose.msra.mxu0 %v289
    %438 = vmatprep.subr.mxu0 0.0
    %439 = vmatpush1.xpose.msra.mxu0 %v292
    %440 = vmatprep.subr.mxu0 0.0
    %441 = vmatpush1.xpose.msra.mxu0 %v295
    %442 = vmatprep.subr.mxu0 0.0
    %443 = vmatpush1.xpose.msra.mxu0 0.0
    %444 = vmatprep.subr.mxu0 0.0
    %445 = vmatpush1.xpose.msra.mxu0 0.0
    %446 = vmatprep.subr.mxu0 0.0
    %447 = vmatpush1.xpose.msra.mxu0 0.0
    %448 = vmatprep.subr.mxu0 0.0
    %449 = vmatpush1.xpose.msra.mxu0 0.0
    %450 = vmatprep.subr.mxu0 0.0
    %451 = vmatpush1.xpose.msra.mxu0 0.0
    %452 = vmatprep.subr.mxu0 0.0
    %453 = vmatpush1.xpose.msra.mxu0 0.0
    %454 = vmatprep.subr.mxu0 0.0
    %455 = vmatpush1.xpose.msra.mxu0 0.0
    %456 = vmatprep.subr.mxu0 0.0
    %457 = vmatpush1.xpose.msra.mxu0 0.0
    %458 = vmatprep.subr.mxu0 0.0
    %459 = vmatpush1.xpose.msra.mxu0 0.0
    %460 = vmatprep.subr.mxu0 0.0
    %461 = vmatpush1.xpose.msra.mxu0 0.0
    %462 = vmatprep.subr.mxu0 0.0
    %463 = vmatpush1.xpose.msra.mxu0 0.0
    %464 = vmatprep.subr.mxu0 0.0
    %465 = vmatpush1.xpose.msra.mxu0 0.0
    %466 = vmatprep.subr.mxu0 0.0
    %467 = vmatpush1.xpose.msra.mxu0 0.0
    %468 = vmatprep.subr.mxu0 0.0
    %469 = vmatpush1.xpose.msra.mxu0 0.0
    %470 = vmatprep.subr.mxu0 0.0
    %471 = vmatpush1.xpose.msra.mxu0 0.0
    %472 = vmatprep.subr.mxu0 0.0
    %473 = vmatpush1.xpose.msra.mxu0 0.0
    %474 = vmatprep.mubr.f32.mxu0 0.0
    %475 = vmatmul.mubr.f32.gmra.mrb[0].mxu0 %v130
    %v476 = vpop.f32.mrb[0].mxu0
    %v477 = vadd.f32 %v91, %v476
    %v478 = vpop.f32.mrb[0].mxu0
    %479 = vmatprep.mubr.f32.mxu0 0.0
    %480 = vmatmul.mubr.f32.gmra.mrb[0].mxu0 %v133
    %v481 = vpop.f32.mrb[0].mxu0
    %v482 = vadd.f32 %v96, %v481
    %v483 = vpop.f32.mrb[0].mxu0
    %484 = vmatprep.mubr.f32.mxu0 0.0
    %485 = vmatmul.mubr.f32.gmra.mrb[0].mxu0 %v136
    %v486 = vpop.f32.mrb[0].mxu0
    %v487 = vadd.f32 %v101, %v486
    %v488 = vpop.f32.mrb[0].mxu0
    %489 = vmatprep.mubr.f32.mxu0 0.0
    %490 = vmatmul.mubr.f32.gmra.mrb[0].mxu0 %v139
    %v491 = vpop.f32.mrb[0].mxu0
    %v492 = vadd.f32 %v106, %v491
    %v493 = vpop.f32.mrb[0].mxu0
    %494 = vmatprep.mubr.f32.mxu0 0.0
    %495 = vmatmul.mubr.f32.gmra.mrb[0].mxu0 %v142
    %v496 = vpop.f32.mrb[0].mxu0
    %v497 = vadd.f32 %v111, %v496
    %v498 = vpop.f32.mrb[0].mxu0
    %499 = vmatprep.mubr.f32.mxu0 0.0
    %500 = vmatmul.mubr.f32.gmra.mrb[0].mxu0 %v145
    %v501 = vpop.f32.mrb[0].mxu0
    %v502 = vadd.f32 %v116, %v501
    %v503 = vpop.f32.mrb[0].mxu0
    %504 = vmatprep.mubr.f32.mxu0 0.0
    %505 = vmatmul.mubr.f32.gmra.mrb[0].mxu0 %v148
    %v506 = vpop.f32.mrb[0].mxu0
    %v507 = vadd.f32 %v121, %v506
    %v508 = vpop.f32.mrb[0].mxu0
    %509 = vmatprep.mubr.f32.mxu0 0.0
    %510 = vmatmul.mubr.f32.gmra.mrb[0].mxu0 %v151
    %v511 = vpop.f32.mrb[0].mxu0
    %v512 = vadd.f32 %v126, %v511
    %v513 = vpop.f32.mrb[0].mxu0
    %514 = vdwg.mxu0
    %v515 = vmax.f32 %v364, 0.0
    %v516 = vmax.f32 %v366, 0.0
    %v517 = vmax.f32 %v477, 0.0
    %v518 = vmax.f32 %v370, 0.0
    %v519 = vmax.f32 %v372, 0.0
    %v520 = vmax.f32 %v482, 0.0
    %v521 = vmax.f32 %v376, 0.0
    %v522 = vmax.f32 %v378, 0.0
    %v523 = vmax.f32 %v487, 0.0
    %v524 = vmax.f32 %v382, 0.0
    %v525 = vmax.f32 %v384, 0.0
    %v526 = vmax.f32 %v492, 0.0
    %v527 = vmax.f32 %v388, 0.0
    %v528 = vmax.f32 %v390, 0.0
    %v529 = vmax.f32 %v497, 0.0
    %v530 = vmax.f32 %v394, 0.0
    %v531 = vmax.f32 %v396, 0.0
    %v532 = vmax.f32 %v502, 0.0
    %v533 = vmax.f32 %v400, 0.0
    %v534 = vmax.f32 %v402, 0.0
    %v535 = vmax.f32 %v507, 0.0
    %v536 = vmax.f32 %v406, 0.0
    %v537 = vmax.f32 %v408, 0.0
    %v538 = vmax.f32 %v512, 0.0
    %v539 = vld [vmem:[%s3] sm:$0xf]
    %v540 = vld [vmem:[%s4] sm:$0xf]
    %v542 = vsel %vm128, %v540, 0
    %544 = vmatprep.subr.mxu0 0.0
    %545 = vmatpush1.xpose.msra.mxu0 %v154
    %546 = vmatprep.subr.mxu0 0.0
    %547 = vmatpush1.xpose.msra.mxu0 %v157
    %548 = vmatprep.subr.mxu0 0.0
    %549 = vmatpush1.xpose.msra.mxu0 %v160
    %550 = vmatprep.subr.mxu0 0.0
    %551 = vmatpush1.xpose.msra.mxu0 %v163
    %552 = vmatprep.subr.mxu0 0.0
    %553 = vmatpush1.xpose.msra.mxu0 %v166
    %554 = vmatprep.subr.mxu0 0.0
    %555 = vmatpush1.xpose.msra.mxu0 %v169
    %556 = vmatprep.subr.mxu0 0.0
    %557 = vmatpush1.xpose.msra.mxu0 %v172
    %558 = vmatprep.subr.mxu0 0.0
    %559 = vmatpush1.xpose.msra.mxu0 %v175
    %560 = vmatprep.subr.mxu0 0.0
    %561 = vmatpush1.xpose.msra.mxu0 %v178
    %562 = vmatprep.subr.mxu0 0.0
    %563 = vmatpush1.xpose.msra.mxu0 %v181
    %564 = vmatprep.subr.mxu0 0.0
    %565 = vmatpush1.xpose.msra.mxu0 %v184
    %566 = vmatprep.subr.mxu0 0.0
    %567 = vmatpush1.xpose.msra.mxu0 %v187
    %568 = vmatprep.subr.mxu0 0.0
    %569 = vmatpush1.xpose.msra.mxu0 %v190
    %570 = vmatprep.subr.mxu0 0.0
    %571 = vmatpush1.xpose.msra.mxu0 %v193
    %572 = vmatprep.subr.mxu0 0.0
    %573 = vmatpush1.xpose.msra.mxu0 %v196
    %574 = vmatprep.subr.mxu0 0.0
    %575 = vmatpush1.xpose.msra.mxu0 %v199
    %576 = vmatprep.subr.mxu0 0.0
    %577 = vmatpush1.xpose.msra.mxu0 %v202
    %578 = vmatprep.subr.mxu0 0.0
    %579 = vmatpush1.xpose.msra.mxu0 %v205
    %580 = vmatprep.subr.mxu0 0.0
    %581 = vmatpush1.xpose.msra.mxu0 %v208
    %582 = vmatprep.subr.mxu0 0.0
    %583 = vmatpush1.xpose.msra.mxu0 %v211
    %584 = vmatprep.subr.mxu0 0.0
    %585 = vmatpush1.xpose.msra.mxu0 %v214
    %586 = vmatprep.subr.mxu0 0.0
    %587 = vmatpush1.xpose.msra.mxu0 %v217
    %588 = vmatprep.subr.mxu0 0.0
    %589 = vmatpush1.xpose.msra.mxu0 %v220
    %590 = vmatprep.subr.mxu0 0.0
    %591 = vmatpush1.xpose.msra.mxu0 %v223
    %592 = vmatprep.subr.mxu0 0.0
    %593 = vmatpush1.xpose.msra.mxu0 %v226
    %594 = vmatprep.subr.mxu0 0.0
    %595 = vmatpush1.xpose.msra.mxu0 %v229
    %596 = vmatprep.subr.mxu0 0.0
    %597 = vmatpush1.xpose.msra.mxu0 %v232
    %598 = vmatprep.subr.mxu0 0.0
    %599 = vmatpush1.xpose.msra.mxu0 %v235
    %600 = vmatprep.subr.mxu0 0.0
    %601 = vmatpush1.xpose.msra.mxu0 %v238
    %602 = vmatprep.subr.mxu0 0.0
    %603 = vmatpush1.xpose.msra.mxu0 %v241
    %604 = vmatprep.subr.mxu0 0.0
    %605 = vmatpush1.xpose.msra.mxu0 %v244
    %606 = vmatprep.subr.mxu0 0.0
    %607 = vmatpush1.xpose.msra.mxu0 %v247
    %608 = vmatprep.mubr.f32.mxu0 0.0
    %609 = vmatmul.mubr.f32.gmra.mrb[0].mxu0 %v542
    %v610 = vpop.f32.mrb[0].mxu0
    %v611 = vadd.f32 0.0, %v610
    %v612 = vpop.f32.mrb[0].mxu0
    %v613 = vadd.f32 0.0, %v612
    %614 = vdwg.mxu0
    %615 = vmatprep.subr.mxu0 0.0
    %616 = vmatpush1.xpose.msra.mxu0 %v250
    %617 = vmatprep.subr.mxu0 0.0
    %618 = vmatpush1.xpose.msra.mxu0 %v253
    %619 = vmatprep.subr.mxu0 0.0
    %620 = vmatpush1.xpose.msra.mxu0 %v256
    %621 = vmatprep.subr.mxu0 0.0
    %622 = vmatpush1.xpose.msra.mxu0 %v259
    %623 = vmatprep.subr.mxu0 0.0
    %624 = vmatpush1.xpose.msra.mxu0 %v262
    %625 = vmatprep.subr.mxu0 0.0
    %626 = vmatpush1.xpose.msra.mxu0 %v265
    %627 = vmatprep.subr.mxu0 0.0
    %628 = vmatpush1.xpose.msra.mxu0 %v268
    %629 = vmatprep.subr.mxu0 0.0
    %630 = vmatpush1.xpose.msra.mxu0 %v271
    %631 = vmatprep.subr.mxu0 0.0
    %632 = vmatpush1.xpose.msra.mxu0 %v274
    %633 = vmatprep.subr.mxu0 0.0
    %634 = vmatpush1.xpose.msra.mxu0 %v277
    %635 = vmatprep.subr.mxu0 0.0
    %636 = vmatpush1.xpose.msra.mxu0 %v280
    %637 = vmatprep.subr.mxu0 0.0
    %638 = vmatpush1.xpose.msra.mxu0 %v283
    %639 = vmatprep.subr.mxu0 0.0
    %640 = vmatpush1.xpose.msra.mxu0 %v286
    %641 = vmatprep.subr.mxu0 0.0
    %642 = vmatpush1.xpose.msra.mxu0 %v289
    %643 = vmatprep.subr.mxu0 0.0
    %644 = vmatpush1.xpose.msra.mxu0 %v292
    %645 = vmatprep.subr.mxu0 0.0
    %646 = vmatpush1.xpose.msra.mxu0 %v295
    %647 = vmatprep.subr.mxu0 0.0
    %648 = vmatpush1.xpose.msra.mxu0 0.0
    %649 = vmatprep.subr.mxu0 0.0
    %650 = vmatpush1.xpose.msra.mxu0 0.0
    %651 = vmatprep.subr.mxu0 0.0
    %652 = vmatpush1.xpose.msra.mxu0 0.0
    %653 = vmatprep.subr.mxu0 0.0
    %654 = vmatpush1.xpose.msra.mxu0 0.0
    %655 = vmatprep.subr.mxu0 0.0
    %656 = vmatpush1.xpose.msra.mxu0 0.0
    %657 = vmatprep.subr.mxu0 0.0
    %658 = vmatpush1.xpose.msra.mxu0 0.0
    %659 = vmatprep.subr.mxu0 0.0
    %660 = vmatpush1.xpose.msra.mxu0 0.0
    %661 = vmatprep.subr.mxu0 0.0
    %662 = vmatpush1.xpose.msra.mxu0 0.0
    %663 = vmatprep.subr.mxu0 0.0
    %664 = vmatpush1.xpose.msra.mxu0 0.0
    %665 = vmatprep.subr.mxu0 0.0
    %666 = vmatpush1.xpose.msra.mxu0 0.0
    %667 = vmatprep.subr.mxu0 0.0
    %668 = vmatpush1.xpose.msra.mxu0 0.0
    %669 = vmatprep.subr.mxu0 0.0
    %670 = vmatpush1.xpose.msra.mxu0 0.0
    %671 = vmatprep.subr.mxu0 0.0
    %672 = vmatpush1.xpose.msra.mxu0 0.0
    %673 = vmatprep.subr.mxu0 0.0
    %674 = vmatpush1.xpose.msra.mxu0 0.0
    %675 = vmatprep.subr.mxu0 0.0
    %676 = vmatpush1.xpose.msra.mxu0 0.0
    %677 = vmatprep.subr.mxu0 0.0
    %678 = vmatpush1.xpose.msra.mxu0 0.0
    %679 = vmatprep.mubr.f32.mxu0 0.0
    %680 = vmatmul.mubr.f32.gmra.mrb[0].mxu0 %v542
    %v681 = vpop.f32.mrb[0].mxu0
    %v682 = vadd.f32 0.0, %v681
    %v683 = vpop.f32.mrb[0].mxu0
    %684 = vdwg.mxu0
    %vm685 = vcmask 523264
    %v687 = vsel %vm685, %v539, 0
    %689 = vmatprep.subr.mxu0 %v516
    %690 = vmatpush1.msra.mxu0 %v515
    %691 = vmatprep.subr.mxu0 %v519
    %692 = vmatpush1.msra.mxu0 %v518
    %693 = vmatprep.subr.mxu0 %v522
    %694 = vmatpush1.msra.mxu0 %v521
    %695 = vmatprep.subr.mxu0 %v525
    %696 = vmatpush1.msra.mxu0 %v524
    %697 = vmatprep.subr.mxu0 %v528
    %698 = vmatpush1.msra.mxu0 %v527
    %699 = vmatprep.subr.mxu0 %v531
    %700 = vmatpush1.msra.mxu0 %v530
    %701 = vmatprep.subr.mxu0 %v534
    %702 = vmatpush1.msra.mxu0 %v533
    %703 = vmatprep.subr.mxu0 %v537
    %704 = vmatpush1.msra.mxu0 %v536
    %705 = vmatprep.subr.mxu0 0.0
    %706 = vmatpush1.msra.mxu0 0.0
    %707 = vmatprep.subr.mxu0 0.0
    %708 = vmatpush1.msra.mxu0 0.0
    %709 = vmatprep.subr.mxu0 0.0
    %710 = vmatpush1.msra.mxu0 0.0
    %711 = vmatprep.subr.mxu0 0.0
    %712 = vmatpush1.msra.mxu0 0.0
    %713 = vmatprep.subr.mxu0 0.0
    %714 = vmatpush1.msra.mxu0 0.0
    %715 = vmatprep.subr.mxu0 0.0
    %716 = vmatpush1.msra.mxu0 0.0
    %717 = vmatprep.subr.mxu0 0.0
    %718 = vmatpush1.msra.mxu0 0.0
    %719 = vmatprep.subr.mxu0 0.0
    %720 = vmatpush1.msra.mxu0 0.0
    %721 = vmatprep.subr.mxu0 0.0
    %722 = vmatpush1.msra.mxu0 0.0
    %723 = vmatprep.subr.mxu0 0.0
    %724 = vmatpush1.msra.mxu0 0.0
    %725 = vmatprep.subr.mxu0 0.0
    %726 = vmatpush1.msra.mxu0 0.0
    %727 = vmatprep.subr.mxu0 0.0
    %728 = vmatpush1.msra.mxu0 0.0
    %729 = vmatprep.subr.mxu0 0.0
    %730 = vmatpush1.msra.mxu0 0.0
    %731 = vmatprep.subr.mxu0 0.0
    %732 = vmatpush1.msra.mxu0 0.0
    %733 = vmatprep.subr.mxu0 0.0
    %734 = vmatpush1.msra.mxu0 0.0
    %735 = vmatprep.subr.mxu0 0.0
    %736 = vmatpush1.msra.mxu0 0.0
    %737 = vmatprep.subr.mxu0 0.0
    %738 = vmatpush1.msra.mxu0 0.0
    %739 = vmatprep.subr.mxu0 0.0
    %740 = vmatpush1.msra.mxu0 0.0
    %741 = vmatprep.subr.mxu0 0.0
    %742 = vmatpush1.msra.mxu0 0.0
    %743 = vmatprep.subr.mxu0 0.0
    %744 = vmatpush1.msra.mxu0 0.0
    %745 = vmatprep.subr.mxu0 0.0
    %746 = vmatpush1.msra.mxu0 0.0
    %747 = vmatprep.subr.mxu0 0.0
    %748 = vmatpush1.msra.mxu0 0.0
    %749 = vmatprep.subr.mxu0 0.0
    %750 = vmatpush1.msra.mxu0 0.0
    %751 = vmatprep.subr.mxu0 0.0
    %752 = vmatpush1.msra.mxu0 0.0
    %753 = vmatprep.mubr.f32.mxu0 0.0
    %754 = vmatmul.mubr.f32.gmra.mrb[0].mxu0 %v687
    %v755 = vpop.f32.mrb[0].mxu0
    %v756 = vadd.f32 %v611, %v755
    %v757 = vpop.f32.mrb[0].mxu0
    %v758 = vadd.f32 %v613, %v757
    %759 = vdwg.mxu0
    %760 = vmatprep.subr.mxu0 0.0
    %761 = vmatpush1.msra.mxu0 %v517
    %762 = vmatprep.subr.mxu0 0.0
    %763 = vmatpush1.msra.mxu0 %v520
    %764 = vmatprep.subr.mxu0 0.0
    %765 = vmatpush1.msra.mxu0 %v523
    %766 = vmatprep.subr.mxu0 0.0
    %767 = vmatpush1.msra.mxu0 %v526
    %768 = vmatprep.subr.mxu0 0.0
    %769 = vmatpush1.msra.mxu0 %v529
    %770 = vmatprep.subr.mxu0 0.0
    %771 = vmatpush1.msra.mxu0 %v532
    %772 = vmatprep.subr.mxu0 0.0
    %773 = vmatpush1.msra.mxu0 %v535
    %774 = vmatprep.subr.mxu0 0.0
    %775 = vmatpush1.msra.mxu0 %v538
    %776 = vmatprep.subr.mxu0 0.0
    %777 = vmatpush1.msra.mxu0 0.0
    %778 = vmatprep.subr.mxu0 0.0
    %779 = vmatpush1.msra.mxu0 0.0
    %780 = vmatprep.subr.mxu0 0.0
    %781 = vmatpush1.msra.mxu0 0.0
    %782 = vmatprep.subr.mxu0 0.0
    %783 = vmatpush1.msra.mxu0 0.0
    %784 = vmatprep.subr.mxu0 0.0
    %785 = vmatpush1.msra.mxu0 0.0
    %786 = vmatprep.subr.mxu0 0.0
    %787 = vmatpush1.msra.mxu0 0.0
    %788 = vmatprep.subr.mxu0 0.0
    %789 = vmatpush1.msra.mxu0 0.0
    %790 = vmatprep.subr.mxu0 0.0
    %791 = vmatpush1.msra.mxu0 0.0
    %792 = vmatprep.subr.mxu0 0.0
    %793 = vmatpush1.msra.mxu0 0.0
    %794 = vmatprep.subr.mxu0 0.0
    %795 = vmatpush1.msra.mxu0 0.0
    %796 = vmatprep.subr.mxu0 0.0
    %797 = vmatpush1.msra.mxu0 0.0
    %798 = vmatprep.subr.mxu0 0.0
    %799 = vmatpush1.msra.mxu0 0.0
    %800 = vmatprep.subr.mxu0 0.0
    %801 = vmatpush1.msra.mxu0 0.0
    %802 = vmatprep.subr.mxu0 0.0
    %803 = vmatpush1.msra.mxu0 0.0
    %804 = vmatprep.subr.mxu0 0.0
    %805 = vmatpush1.msra.mxu0 0.0
    %806 = vmatprep.subr.mxu0 0.0
    %807 = vmatpush1.msra.mxu0 0.0
    %808 = vmatprep.subr.mxu0 0.0
    %809 = vmatpush1.msra.mxu0 0.0
    %810 = vmatprep.subr.mxu0 0.0
    %811 = vmatpush1.msra.mxu0 0.0
    %812 = vmatprep.subr.mxu0 0.0
    %813 = vmatpush1.msra.mxu0 0.0
    %814 = vmatprep.subr.mxu0 0.0
    %815 = vmatpush1.msra.mxu0 0.0
    %816 = vmatprep.subr.mxu0 0.0
    %817 = vmatpush1.msra.mxu0 0.0
    %818 = vmatprep.subr.mxu0 0.0
    %819 = vmatpush1.msra.mxu0 0.0
    %820 = vmatprep.subr.mxu0 0.0
    %821 = vmatpush1.msra.mxu0 0.0
    %822 = vmatprep.subr.mxu0 0.0
    %823 = vmatpush1.msra.mxu0 0.0
    %824 = vmatprep.mubr.f32.mxu0 0.0
    %825 = vmatmul.mubr.f32.gmra.mrb[0].mxu0 %v687
    %v826 = vpop.f32.mrb[0].mxu0
    %v827 = vadd.f32 %v682, %v826
    %v828 = vpop.f32.mrb[0].mxu0
    %829 = vdwg.mxu0
    %v830 = vld [vmem:[%s5] sm:$0xf]
    %832 = vset.pattern.permute.xlu0 0
    %833 = vperm.xlu0 %832, %v830
    %v834 = vpop.permute.xlu0 %833
    %v836 = vadd.f32 %v756, %v834
    %v837 = vadd.f32 %v758, %v834
    %v838 = vadd.f32 %v827, %v834
    %v839 = vmax.f32 %v836, 0.0
    %v840 = vmax.f32 %v837, 0.0
    %v841 = vmax.f32 %v838, 0.0
    %v842 = vand.u32 2147483647, %v836
    %v843 = vand.u32 2147483647, %v837
    %v844 = vand.u32 2147483647, %v838
    %v845 = vsub.f32 0.0, %v842
    %v846 = vsub.f32 0.0, %v843
    %v847 = vsub.f32 0.0, %v844
    %v848 = vmul.f32 %v845, 1.442695
    %v849 = vpow.pop %v848
    %v850 = vmul.f32 %v846, 1.442695
    %v851 = vpow.pop %v850
    %v852 = vmul.f32 %v847, 1.442695
    %v853 = vpow.pop %v852
    %v854 = vadd.f32 %v849, 1.0
    %v855 = vlog2.pop %v854
    %v856 = vmul.f32 %v855, 0.6931472
    %v857 = vmul.f32 -0.5, %v849
    %v858 = vadd.f32 %v857, 1.0
    %v859 = vmul.f32 %v858, %v849
    %v860 = vand.u32 2147483647, %v849
    %vm861 = vcmp.lt.f32.partialorder %v860, 0.0004427343
    %v862 = vsel %vm861, %v859, %v856
    %v863 = vadd.f32 %v851, 1.0
    %v864 = vlog2.pop %v863
    %v865 = vmul.f32 %v864, 0.6931472
    %v866 = vmul.f32 -0.5, %v851
    %v867 = vadd.f32 %v866, 1.0
    %v868 = vmul.f32 %v867, %v851
    %v869 = vand.u32 2147483647, %v851
    %vm870 = vcmp.lt.f32.partialorder %v869, 0.0004427343
    %v871 = vsel %vm870, %v868, %v865
    %v872 = vadd.f32 %v853, 1.0
    %v873 = vlog2.pop %v872
    %v874 = vmul.f32 %v873, 0.6931472
    %v875 = vmul.f32 -0.5, %v853
    %v876 = vadd.f32 %v875, 1.0
    %v877 = vmul.f32 %v876, %v853
    %v878 = vand.u32 2147483647, %v853
    %vm879 = vcmp.lt.f32.partialorder %v878, 0.0004427343
    %v880 = vsel %vm879, %v877, %v874
    %v881 = vadd.f32 %v839, %v862
    %v882 = vadd.f32 %v840, %v871
    %v883 = vadd.f32 %v841, %v880
    %v884 = vadd.f32 %v881, 0.01
    %v885 = vadd.f32 %v882, 0.01
    %v886 = vadd.f32 %v883, 0.01
    %v889 = vcombine.low %v884, %v885
    %891 = vst [vmem:[#allocation2] sm:$0xff] %v889
    %892 = vst [vmem:[#allocation2 + $0x8] sm:$0xf] %v886
    // Predicated region
    $region26: #{tpu_custom_call.1} parent=1 // pred_check
      _
    $region27: #{tpu_custom_call.1} parent=1 // pred_check_branch
      %894 = sbr.rel (0) target = $region29
    $region28: #{tpu_custom_call.1} parent=1 // pred_region
      %s896 = ssub.s32 192, 192
      %897 = vsyncadd [#allocation3], %s896
      %s899 = sshll.u32 [#allocation2], 4
      %s900 = int_to_ptr.vmem [resolvable:$true] %s899
      %902 = dma.vmem_to_hbm [thread:$0]  %s900, 192, %s6, [#allocation3]
    $region29: #{tpu_custom_call.1} parent=1 // pred_fallthru
      _
    // Predicated region
    $region30: #{tpu_custom_call.1} parent=1 // pred_check
      _
    $region31: #{tpu_custom_call.1} parent=1 // pred_check_branch
      %904 = sbr.rel (0) target = $region33
    $region32: #{tpu_custom_call.1} parent=1 // pred_region
      %905 = dma.done [#allocation3], 192
    $region33: #{tpu_custom_call.1} parent=1 // pred_fallthru
      _
    %906 = vsyncpa [#allocation3], 1

</llo_original>
